<compile_context>
chip_gen: v7x
topology: tpu7x:2x2x1
jax: 0.10.0
libtpu: 0.0.40
codegen_flags: <defaults>
</compile_context>

<pallas_src>
import functools
import math

import jax
import jax.numpy as jnp
from jax.experimental import pallas as pl
from jax.experimental.pallas import tpu as pltpu

_LN_EPS = 1e-5
_LANE = 128                       # lane-dense feature padding target
_DEFAULT_ROW_TILE = 256           # token (M) tile; multiple of the MXU M dim on all gens


def _round_up(x, m):
    return ((x + m - 1) // m) * m


@functools.lru_cache(maxsize=None)
def _vmem_limit_bytes():
    # Generation-dependent VMEM budget: ~3/4 of per-core VMEM, capped at 100 MiB.
    cap = 64 * 1024 * 1024
    try:
        info = pltpu.get_tpu_info()
        cap = int(getattr(info, "vmem_capacity_bytes", cap) or cap)
    except Exception:
        pass
    return int(min(cap * 3 // 4, 100 * 1024 * 1024))


def _compiler_params():
    return pltpu.CompilerParams(
        dimension_semantics=("parallel",),
        vmem_limit_bytes=_vmem_limit_bytes(),
    )


def _row_tiling(n_rows, row_tile):
    # Big MXU-friendly row tile, shrunk (a) for tiny problems and (b) when more than half
    # of the last tile would be padding (review: cap pad waste).
    rt = min(row_tile, _round_up(max(n_rows, 1), 8))
    while rt > 64 and _round_up(n_rows, rt) - n_rows > rt // 2:
        rt //= 2
    rt = max(_round_up(rt, 8), 8)
    return rt, _round_up(n_rows, rt)


def _pad2(a, rows, cols):
    return jnp.pad(a, ((0, rows - a.shape[0]), (0, cols - a.shape[1])))


def _pad_row(v, cols):
    return jnp.pad(v, (0, cols - v.shape[0])).reshape(1, cols)


# ----------------------------- kernel bodies ---------------------------------


def _qkv_kernel(hdk_p, hdv_p, x_ref, w_ref, b_ref, q_ref, k_ref, v_ref):
    """Fused tokenwise Q/K/V projection: one matmul on the concatenated (padded) weight,
    three lane-dense outputs. Padded weight columns / bias entries are zero, so padded
    output lanes are exactly zero."""
    x = x_ref[...]                                            # matmul dtype (bf16/f32)
    y = jnp.dot(x, w_ref[...], preferred_element_type=jnp.float32)
    y = y + b_ref[...].astype(jnp.float32)
    q_ref[...] = y[:, :hdk_p].astype(q_ref.dtype)             # lane-aligned static slices
    k_ref[...] = y[:, hdk_p:2 * hdk_p].astype(k_ref.dtype)
    v_ref[...] = y[:, 2 * hdk_p:2 * hdk_p + hdv_p].astype(v_ref.dtype)


def _attn_kernel(n_heads, d_k, d_v, sm_scale, approx_recip,
                 q_ref, k_ref, v_ref, ctx_ref, attn_ref):
    """One batch, all heads: softmax(Q K^T * sm_scale) V per head; emits the attention
    map in the reference (B, H, S, S) layout. Matmul operands stay in the (bf16) input
    dtype; softmax statistics and accumulation are f32."""
    q_all = q_ref[0]                                          # (S, hdk_p)
    k_all = k_ref[0]
    v_all = v_ref[0]
    ctx_parts = []
    for h in range(n_heads):                                  # static, unrolled
        q = q_all[:, h * d_k:(h + 1) * d_k]                   # (S, d_k)
        k = k_all[:, h * d_k:(h + 1) * d_k]
        v = v_all[:, h * d_v:(h + 1) * d_v]                   # (S, d_v)
        s = jax.lax.dot_general(q, k, (((1,), (1,)), ((), ())),
                                preferred_element_type=jnp.float32) * sm_scale
        m = jnp.max(s, axis=-1, keepdims=True)                # stable softmax
        e = jnp.exp(s - m)
        inv = pl.reciprocal(jnp.sum(e, axis=-1, keepdims=True), approx=approx_recip)
        p = e * inv
        attn_ref[0, h] = p.astype(attn_ref.dtype)
        ctx_parts.append(jnp.dot(p.astype(v.dtype), v,
                                 preferred_element_type=jnp.float32))
    ctx_all = jnp.concatenate(ctx_parts, axis=-1) if n_heads > 1 else ctx_parts[0]
    ctx_ref[0] = ctx_all.astype(ctx_ref.dtype)                # (S, H*d_v), one store


def _proj_ffn_kernel(d_model, ctx_ref, res_ref, wo_ref, bo_ref, g1_ref, be1_ref,
                     w1_ref, b1_ref, w2_ref, b2_ref, g2_ref, be2_ref, o_ref):
    """Fused: y = LN1(ctx @ wo + bo + x); out = LN2(relu(y @ w1 + b1) @ w2 + b2 + y).
    LayerNorm uses the two-pass (t - mean)^2 variance, masked over padded lanes, so it is
    exact under zero lane padding and free of the E[t^2]-E[t]^2 cancellation."""
    inv_d = 1.0 / d_model

    ctx = ctx_ref[...]                                        # matmul dtype
    y = jnp.dot(ctx, wo_ref[...], preferred_element_type=jnp.float32)
    y = y + bo_ref[...].astype(jnp.float32) + res_ref[...].astype(jnp.float32)

    lane = jax.lax.broadcasted_iota(jnp.int32, y.shape, 1)
    valid = lane < d_model

    def layer_norm(t, g_ref_, b_ref_):
        mean = jnp.sum(t, axis=-1, keepdims=True) * inv_d     # pad lanes are zero -> exact
        c = jnp.where(valid, t - mean, 0.0)
        var = jnp.sum(c * c, axis=-1, keepdims=True) * inv_d
        return (c * jax.lax.rsqrt(var + _LN_EPS) * g_ref_[...].astype(jnp.float32)
                + b_ref_[...].astype(jnp.float32))

    y1 = layer_norm(y, g1_ref, be1_ref)                       # pad lanes exactly 0
    h = jnp.dot(y1.astype(w1_ref.dtype), w1_ref[...], preferred_element_type=jnp.float32)
    h = jnp.maximum(h + b1_ref[...].astype(jnp.float32), 0.0)
    z = jnp.dot(h.astype(w2_ref.dtype), w2_ref[...], preferred_element_type=jnp.float32)
    z = z + b2_ref[...].astype(jnp.float32) + y1
    o_ref[...] = layer_norm(z, g2_ref, be2_ref).astype(o_ref.dtype)


# ----------------------------- pallas_call wrappers ---------------------------------


def _qkv_projection(xp, wqkv, bqkv, *, hdk_p, hdv_p, rt):
    n_p, d_p = xp.shape
    c_p = wqkv.shape[1]
    out_dtype = xp.dtype
    cost = pl.CostEstimate(
        flops=2 * n_p * d_p * c_p,
        transcendentals=0,
        bytes_accessed=(xp.size * xp.dtype.itemsize + wqkv.size * wqkv.dtype.itemsize
                        + n_p * c_p * out_dtype.itemsize),
    )
    return pl.pallas_call(
        functools.partial(_qkv_kernel, hdk_p, hdv_p),
        out_shape=(jax.ShapeDtypeStruct((n_p, hdk_p), out_dtype),
                   jax.ShapeDtypeStruct((n_p, hdk_p), out_dtype),
                   jax.ShapeDtypeStruct((n_p, hdv_p), out_dtype)),
        grid_spec=pltpu.PrefetchScalarGridSpec(
            num_scalar_prefetch=0,
            grid=(n_p // rt,),
            in_specs=[
                pl.BlockSpec((rt, d_p), lambda i: (i, 0)),
                pl.BlockSpec((d_p, c_p), lambda i: (0, 0)),
                pl.BlockSpec((1, c_p), lambda i: (0, 0)),
            ],
            out_specs=[
                pl.BlockSpec((rt, hdk_p), lambda i: (i, 0)),
                pl.BlockSpec((rt, hdk_p), lambda i: (i, 0)),
                pl.BlockSpec((rt, hdv_p), lambda i: (i, 0)),
            ],
        ),
        compiler_params=_compiler_params(),
        cost_estimate=cost,
    )(xp, wqkv, bqkv)


def _sdp_attention(q3, k3, v3, *, n_heads, d_k, d_v, sm_scale, approx_recip, out_dtype):
    B, S, hdk_p = q3.shape
    hdv_p = v3.shape[2]
    cost = pl.CostEstimate(
        flops=2 * B * n_heads * S * S * (d_k + d_v),
        transcendentals=B * n_heads * S * S,
        bytes_accessed=((q3.size + k3.size + v3.size) * q3.dtype.itemsize
                        + B * S * n_heads * d_v * jnp.dtype(out_dtype).itemsize
                        + B * n_heads * S * S * 4),
    )
    ctx, attn = pl.pallas_call(
        functools.partial(_attn_kernel, n_heads, d_k, d_v, sm_scale, approx_recip),
        out_shape=(jax.ShapeDtypeStruct((B, S, n_heads * d_v), out_dtype),
                   jax.ShapeDtypeStruct((B, n_heads, S, S), jnp.float32)),
        grid_spec=pltpu.PrefetchScalarGridSpec(
            num_scalar_prefetch=0,
            grid=(B,),
            in_specs=[
                pl.BlockSpec((1, S, hdk_p), lambda b: (b, 0, 0)),
                pl.BlockSpec((1, S, hdk_p), lambda b: (b, 0, 0)),
                pl.BlockSpec((1, S, hdv_p), lambda b: (b, 0, 0)),
            ],
            out_specs=[
                pl.BlockSpec((1, S, n_heads * d_v), lambda b: (b, 0, 0)),
                pl.BlockSpec((1, n_heads, S, S), lambda b: (b, 0, 0, 0)),
            ],
        ),
        compiler_params=_compiler_params(),
        cost_estimate=cost,
    )(q3, k3, v3)
    return ctx, attn


def _proj_ffn(ctx2, xp, prepared, meta, *, rt, out_dtype):
    n_p, d_p = xp.shape
    f_p = meta["f_p"]
    hdv = ctx2.shape[1]
    w_bytes = (prepared["wo"].size + prepared["w1"].size + prepared["w2"].size) \
        * prepared["w1"].dtype.itemsize
    cost = pl.CostEstimate(
        flops=2 * n_p * (hdv * d_p + 2 * d_p * f_p) + 20 * n_p * d_p,
        transcendentals=2 * n_p,
        bytes_accessed=(ctx2.size * ctx2.dtype.itemsize + xp.size * xp.dtype.itemsize
                        + w_bytes + n_p * d_p * jnp.dtype(out_dtype).itemsize),
    )
    return pl.pallas_call(
        functools.partial(_proj_ffn_kernel, meta["d_model"]),
        out_shape=jax.ShapeDtypeStruct((n_p, d_p), out_dtype),
        grid_spec=pltpu.PrefetchScalarGridSpec(
            num_scalar_prefetch=0,
            grid=(n_p // rt,),
            in_specs=[
                pl.BlockSpec((rt, hdv), lambda i: (i, 0)),     # attention context
                pl.BlockSpec((rt, d_p), lambda i: (i, 0)),     # residual x (padded once)
                pl.BlockSpec((hdv, d_p), lambda i: (0, 0)),    # wo
                pl.BlockSpec((1, d_p), lambda i: (0, 0)),      # bo
                pl.BlockSpec((1, d_p), lambda i: (0, 0)),      # ln1 gamma
                pl.BlockSpec((1, d_p), lambda i: (0, 0)),      # ln1 beta
                pl.BlockSpec((d_p, f_p), lambda i: (0, 0)),    # w1
                pl.BlockSpec((1, f_p), lambda i: (0, 0)),      # b1
                pl.BlockSpec((f_p, d_p), lambda i: (0, 0)),    # w2
                pl.BlockSpec((1, d_p), lambda i: (0, 0)),      # b2
                pl.BlockSpec((1, d_p), lambda i: (0, 0)),      # ln2 gamma
                pl.BlockSpec((1, d_p), lambda i: (0, 0)),      # ln2 beta
            ],
            out_specs=pl.BlockSpec((rt, d_p), lambda i: (i, 0)),
        ),
        compiler_params=_compiler_params(),
        cost_estimate=cost,
    )(ctx2, xp, prepared["wo"], prepared["bo"], prepared["ln1_g"], prepared["ln1_b"],
      prepared["w1"], prepared["b1"], prepared["w2"], prepared["b2"],
      prepared["ln2_g"], prepared["ln2_b"])


# ----------------------------- parameter preparation ---------------------------------


def prepare_encoder_params(params, *, n_heads, matmul_dtype=jnp.bfloat16):
    """One-time weight prep (hoisted out of the forward path): concat Q/K/V weights,
    zero-pad feature dims to lane-dense multiples of 128, cast matmul weights to bf16."""
    D = params["wq"].shape[0]
    HDK = params["wq"].shape[1]
    HDV = params["wv"].shape[1]
    d_ff = params["w1"].shape[1]
    d_p = _round_up(D, _LANE)
    f_p = _round_up(d_ff, _LANE)
    hdk_p = _round_up(HDK, _LANE)
    hdv_p = _round_up(HDV, _LANE)

    def padw(w, r, c):
        return _pad2(w, r, c).astype(matmul_dtype)

    def padb(b, c):
        return _pad_row(b, c).astype(jnp.float32)

    wqkv = jnp.concatenate([padw(params["wq"], d_p, hdk_p),
                            padw(params["wk"], d_p, hdk_p),
                            padw(params["wv"], d_p, hdv_p)], axis=1)
    bqkv = jnp.concatenate([padb(params["bq"], hdk_p),
                            padb(params["bk"], hdk_p),
                            padb(params["bv"], hdv_p)], axis=1)

    prepared = dict(
        wqkv=wqkv, bqkv=bqkv,
        wo=_pad2(params["wo"], HDV, d_p).astype(matmul_dtype),
        bo=padb(params["bo"], d_p),
        ln1_g=padb(params["ln1_g"], d_p), ln1_b=padb(params["ln1_b"], d_p),
        w1=padw(params["w1"], d_p, f_p), b1=padb(params["b1"], f_p),
        w2=padw(params["w2"], f_p, d_p), b2=padb(params["b2"], d_p),
        ln2_g=padb(params["ln2_g"], d_p), ln2_b=padb(params["ln2_b"], d_p),
    )
    meta = dict(n_heads=n_heads, d_k=HDK // n_heads, d_v=HDV // n_heads,
                d_model=D, d_ff=d_ff, d_p=d_p, f_p=f_p, hdk_p=hdk_p, hdv_p=hdv_p,
                matmul_dtype=jnp.dtype(matmul_dtype))
    return prepared, meta


# ----------------------------- EncoderLayer forward ---------------------------------


def encoder_layer(x, prepared, meta, *, row_tile=_DEFAULT_ROW_TILE):
    """Pallas forward of EncoderLayer. Returns (enc_outputs [B,S,D], attn [B,H,S,S])."""
    B, S, D = x.shape
    mm_dtype = meta["matmul_dtype"]
    H, d_k, d_v = meta["n_heads"], meta["d_k"], meta["d_v"]
    hdk_p, hdv_p, d_p = meta["hdk_p"], meta["hdv_p"], meta["d_p"]
    N = B * S
    rt, n_p = _row_tiling(N, row_tile)

    # x padded / cast exactly once; reused as projection input and as the LN1 residual.
    xp = _pad2(x.reshape(N, D), n_p, d_p).astype(mm_dtype)

    # --- fused Q/K/V projection (single tokenwise matmul, bf16 outputs) ---
    q, k, v = _qkv_projection(xp, prepared["wqkv"], prepared["bqkv"],
                              hdk_p=hdk_p, hdv_p=hdv_p, rt=rt)
    # Free reshapes only — no XLA transposes; heads are packed along the lane dim.
    q3 = q[:N].reshape(B, S, hdk_p)
    k3 = k[:N].reshape(B, S, hdk_p)
    v3 = v[:N].reshape(B, S, hdv_p)

    # --- head-batched scaled dot-product attention, one batch per grid step ---
    approx_recip = mm_dtype != jnp.dtype(jnp.float32)
    ctx, attn = _sdp_attention(q3, k3, v3, n_heads=H, d_k=d_k, d_v=d_v,
                               sm_scale=1.0 / math.sqrt(d_k),
                               approx_recip=approx_recip, out_dtype=mm_dtype)
    ctx2 = ctx.reshape(N, H * d_v)
    if n_p != N:
        ctx2 = jnp.pad(ctx2, ((0, n_p - N), (0, 0)))

    # --- fused output projection + LN1 + position-wise FFN + LN2 ---
    out = _proj_ffn(ctx2, xp, prepared, meta, rt=rt, out_dtype=x.dtype)
    return out[:N, :D].reshape(B, S, D), attn


# ----------------------------- pure-JAX reference ---------------------------------


def _layer_norm_ref(y, g, b):
    m = jnp.mean(y, axis=-1, keepdims=True)
    v = jnp.mean((y - m) ** 2, axis=-1, keepdims=True)
    return (y - m) / jnp.sqrt(v + _LN_EPS) * g + b


def reference_encoder_layer(x, params, *, n_heads):
    B, S, D = x.shape
    dk = params["wq"].shape[1] // n_heads
    dv = params["wv"].shape[1] // n_heads
    q = (x @ params["wq"] + params["bq"]).reshape(B, S, n_heads, dk).transpose(0, 2, 1, 3)
    k = (x @ params["wk"] + params["bk"]).reshape(B, S, n_heads, dk).transpose(0, 2, 1, 3)
    v = (x @ params["wv"] + params["bv"]).reshape(B, S, n_heads, dv).transpose(0, 2, 1, 3)
    scores = jnp.einsum("bhqd,bhkd->bhqk", q, k) / math.sqrt(dk)
    attn = jax.nn.softmax(scores, axis=-1)
    ctx = jnp.einsum("bhqk,bhkd->bhqd", attn, v)
    ctx = ctx.transpose(0, 2, 1, 3).reshape(B, S, n_heads * dv)
    y = _layer_norm_ref(ctx @ params["wo"] + params["bo"] + x,
                        params["ln1_g"], params["ln1_b"])
    h = jnp.maximum(y @ params["w1"] + params["b1"], 0.0)
    z = h @ params["w2"] + params["b2"]
    out = _layer_norm_ref(z + y, params["ln2_g"], params["ln2_b"])
    return out, attn


if __name__ == "__main__":
    # Small shapes implied by the forward: batch=2, seq=8, d_model=32, d_ff=64,
    # n_heads=4, d_k=d_v=8.
    B, S, d_model, d_ff, n_heads, d_k, d_v = 2, 8, 32, 64, 4, 8, 8

    key = jax.random.PRNGKey(0)
    keys = jax.random.split(key, 16)
    x = jax.random.normal(keys[0], (B, S, d_model), dtype=jnp.float32)

    def w(k, shape, scale=0.1):
        return scale * jax.random.normal(k, shape, dtype=jnp.float32)

    # Linear / Conv1d(ks=1) weights stored matmul-ready as (in, out) matrices.
    params = dict(
        wq=w(keys[1], (d_model, n_heads * d_k)), bq=w(keys[2], (n_heads * d_k,)),
        wk=w(keys[3], (d_model, n_heads * d_k)), bk=w(keys[4], (n_heads * d_k,)),
        wv=w(keys[5], (d_model, n_heads * d_v)), bv=w(keys[6], (n_heads * d_v,)),
        wo=w(keys[7], (n_heads * d_v, d_model)), bo=w(keys[8], (d_model,)),
        ln1_g=1.0 + w(keys[9], (d_model,)), ln1_b=w(keys[10], (d_model,)),
        w1=w(keys[11], (d_model, d_ff)), b1=w(keys[12], (d_ff,)),
        w2=w(keys[13], (d_ff, d_model)), b2=w(keys[14], (d_model,)),
        ln2_g=1.0 + w(keys[15], (d_model,)), ln2_b=jnp.zeros((d_model,), jnp.float32),
    )

    ref_out, ref_attn = reference_encoder_layer(x, params, n_heads=n_heads)

    # 1) Semantics check with f32 matmul operands / f32 intermediates (tight tolerance).
    prep32, meta32 = prepare_encoder_params(params, n_heads=n_heads,
                                            matmul_dtype=jnp.float32)
    out_f32, attn_f32 = encoder_layer(x, prep32, meta32)
    out_f32 = jax.block_until_ready(out_f32)
    assert out_f32.shape == (B, S, d_model)
    assert attn_f32.shape == (B, n_heads, S, S)
    assert jnp.allclose(out_f32, ref_out, atol=1e-4, rtol=1e-4), "f32 output mismatch"
    assert jnp.allclose(attn_f32, ref_attn, atol=1e-4, rtol=1e-4), "f32 attn mismatch"

    # 2) Performance path (default): bf16 MXU operands + bf16 intermediates, f32 stats.
    prep_bf, meta_bf = prepare_encoder_params(params, n_heads=n_heads,
                                              matmul_dtype=jnp.bfloat16)
    out_bf16, attn_bf16 = encoder_layer(x, prep_bf, meta_bf)
    out_bf16 = jax.block_until_ready(out_bf16)
    assert jnp.allclose(out_bf16, ref_out, atol=5e-2, rtol=5e-2), "bf16 output mismatch"
    assert jnp.allclose(attn_bf16, ref_attn, atol=5e-2, rtol=5e-2), "bf16 attn mismatch"

    print("KERNEL_OK")
</pallas_src>

<mosaic_0001>
module attributes {stable_mosaic.version = 11 : i64} {
  func.func @_qkv_kernel(%arg0: i32, %arg1: memref<16x128xf32, #tpu.memory_space<vmem>>, %arg2: memref<128x384xf32, #tpu.memory_space<vmem>>, %arg3: memref<1x384xf32, #tpu.memory_space<vmem>>, %arg4: memref<16x128xf32, #tpu.memory_space<vmem>>, %arg5: memref<16x128xf32, #tpu.memory_space<vmem>>, %arg6: memref<16x128xf32, #tpu.memory_space<vmem>>) attributes {dimension_semantics = [#tpu.dimension_semantics<parallel>], iteration_bounds = array<i64: 1>, scalar_prefetch = 0 : i64, scratch_operands = 0 : i64, tpu.core_type = #tpu.core_type<tc>, window_params = [{transform_indices = @transform_0, window_bounds = array<i64: 16, 128>}, {pipeline_mode = #tpu.pipeline_mode<synchronous>, transform_indices = @transform_1, window_bounds = array<i64: 128, 384>}, {pipeline_mode = #tpu.pipeline_mode<synchronous>, transform_indices = @transform_2, window_bounds = array<i64: 1, 384>}, {transform_indices = @transform_3, window_bounds = array<i64: 16, 128>}, {transform_indices = @transform_4, window_bounds = array<i64: 16, 128>}, {transform_indices = @transform_5, window_bounds = array<i64: 16, 128>}]} {
    %c0 = arith.constant 0 : index
    %c0_0 = arith.constant 0 : index
    %0 = vector.load %arg1[%c0, %c0_0] : memref<16x128xf32, #tpu.memory_space<vmem>>, vector<16x128xf32>
    %c0_1 = arith.constant 0 : index
    %c0_2 = arith.constant 0 : index
    %1 = vector.load %arg2[%c0_1, %c0_2] : memref<128x384xf32, #tpu.memory_space<vmem>>, vector<128x384xf32>
    %cst = arith.constant dense<0.000000e+00> : vector<16x384xf32>
    %2 = tpu.matmul %0, %1, %cst {dimension_numbers = #tpu.dot_dimension_numbers<[1], [0], [0], [1], [0, 0, 1, 1], [], []>} : vector<16x128xf32>, vector<128x384xf32>, vector<16x384xf32> -> vector<16x384xf32>
    %c0_3 = arith.constant 0 : index
    %c0_4 = arith.constant 0 : index
    %3 = vector.load %arg3[%c0_3, %c0_4] : memref<1x384xf32, #tpu.memory_space<vmem>>, vector<1x384xf32>
    %4 = vector.broadcast %3 : vector<1x384xf32> to vector<16x384xf32>
    %5 = arith.addf %2, %4 : vector<16x384xf32>
    %6 = vector.extract_strided_slice %5 {offsets = [0, 0], sizes = [16, 128], strides = [1, 1]} : vector<16x384xf32> to vector<16x128xf32>
    %c0_5 = arith.constant 0 : index
    %c0_6 = arith.constant 0 : index
    %7 = vector.load %arg4[%c0_5, %c0_6] : memref<16x128xf32, #tpu.memory_space<vmem>>, vector<16x128xf32>
    tpu.vector_store %arg4[%c0_5, %c0_6], %6 {strides = array<i32>} : memref<16x128xf32, #tpu.memory_space<vmem>>, vector<16x128xf32>,
    %8 = vector.extract_strided_slice %5 {offsets = [0, 128], sizes = [16, 128], strides = [1, 1]} : vector<16x384xf32> to vector<16x128xf32>
    %c0_7 = arith.constant 0 : index
    %c0_8 = arith.constant 0 : index
    %9 = vector.load %arg5[%c0_7, %c0_8] : memref<16x128xf32, #tpu.memory_space<vmem>>, vector<16x128xf32>
    tpu.vector_store %arg5[%c0_7, %c0_8], %8 {strides = array<i32>} : memref<16x128xf32, #tpu.memory_space<vmem>>, vector<16x128xf32>,
    %10 = vector.extract_strided_slice %5 {offsets = [0, 256], sizes = [16, 128], strides = [1, 1]} : vector<16x384xf32> to vector<16x128xf32>
    %c0_9 = arith.constant 0 : index
    %c0_10 = arith.constant 0 : index
    %11 = vector.load %arg6[%c0_9, %c0_10] : memref<16x128xf32, #tpu.memory_space<vmem>>, vector<16x128xf32>
    tpu.vector_store %arg6[%c0_9, %c0_10], %10 {strides = array<i32>} : memref<16x128xf32, #tpu.memory_space<vmem>>, vector<16x128xf32>,
    return
  }
  func.func @transform_0(%arg0: i32) -> (i32, i32) {
    %c0_i32 = arith.constant 0 : i32
    %c0_i32_0 = arith.constant 0 : i32
    return %arg0, %c0_i32 : i32, i32
  }
  func.func @transform_1(%arg0: i32) -> (i32, i32) {
    %c0_i32 = arith.constant 0 : i32
    %c0_i32_0 = arith.constant 0 : i32
    %c0_i32_1 = arith.constant 0 : i32
    return %c0_i32, %c0_i32_0 : i32, i32
  }
  func.func @transform_2(%arg0: i32) -> (i32, i32) {
    %c0_i32 = arith.constant 0 : i32
    %c0_i32_0 = arith.constant 0 : i32
    %c0_i32_1 = arith.constant 0 : i32
    return %c0_i32, %c0_i32_0 : i32, i32
  }
  func.func @transform_3(%arg0: i32) -> (i32, i32) {
    %c0_i32 = arith.constant 0 : i32
    %c0_i32_0 = arith.constant 0 : i32
    return %arg0, %c0_i32 : i32, i32
  }
  func.func @transform_4(%arg0: i32) -> (i32, i32) {
    %c0_i32 = arith.constant 0 : i32
    %c0_i32_0 = arith.constant 0 : i32
    return %arg0, %c0_i32 : i32, i32
  }
  func.func @transform_5(%arg0: i32) -> (i32, i32) {
    %c0_i32 = arith.constant 0 : i32
    %c0_i32_0 = arith.constant 0 : i32
    return %arg0, %c0_i32 : i32, i32
  }
}

</mosaic_0001>

<llo_original>
// kernel: tpu_custom_call.1
$region0: #{tpu_custom_call.1}
  #allocation0 [shape = 'u32[]', space=smem, size = 0x4, offset = 0x4, fixed_abs, tag = 'smem constant byte address 0x4 - core index']
  #allocation1 [shape = 'u32[144,128]{1,0:T(1,128)}', space=vmem, size = 0x12000, scoped, tag = 'internal scratch']
  %s0 = inlined_call_operand.hbm [shape: f32[16,128], index: 0, kind: input, shape index: {}]
  %s1 = inlined_call_operand.hbm [shape: f32[128,384], index: 1, kind: input, shape index: {}]
  %s2 = inlined_call_operand.vmem [shape: f32[1,384], index: 2, kind: input, shape index: {}]
  %s3 = inlined_call_operand.hbm [shape: f32[16,128], index: 3, kind: output, shape index: {0}]
  %s4 = inlined_call_operand.hbm [shape: f32[16,128], index: 4, kind: output, shape index: {1}]
  %s5 = inlined_call_operand.hbm [shape: f32[16,128], index: 5, kind: output, shape index: {2}]
  %6 = xla_tuple %s3, %s4, %s5
  %s7 = sld [smem:[#allocation0]]
  $region46: #{tpu_custom_call.1} parent=0
    _
  %s9 = ssub.s32 1, %s7
  %s10 = scalar_select 0, %s9, %s7
  $region1: #{tpu_custom_call.1} parent=0
    #allocation2 [shape = 'u8[8192]{0}', space=vmem, size = 0x2000, scoped, tag = 'input window, operand 0, single buffered']
    #allocation3 [shape = 's32[1]{0}', space=sflag, size = 0x4, scoped, tag = 'scoped memory for tpu_custom_call.1']
    #allocation4 [shape = 's32[1]{0}', space=sflag, size = 0x4, scoped, tag = 'scoped memory for tpu_custom_call.1']
    #allocation5 [shape = 'u8[196608]{0}', space=vmem, size = 0x30000, scoped, tag = 'input window, operand 1, single buffered']
    #allocation6 [shape = 's32[1]{0}', space=sflag, size = 0x4, scoped, tag = 'scoped memory for tpu_custom_call.1']
    #allocation7 [shape = 'u8[8192]{0}', space=vmem, size = 0x2000, scoped, tag = 'output window, operand 0, single buffered']
    #allocation8 [shape = 'u8[8192]{0}', space=vmem, size = 0x2000, scoped, tag = 'output window, operand 1, single buffered']
    #allocation9 [shape = 's32[1]{0}', space=sflag, size = 0x4, scoped, tag = 'scoped memory for tpu_custom_call.1']
    #allocation10 [shape = 'u8[8192]{0}', space=vmem, size = 0x2000, scoped, tag = 'output window, operand 2, single buffered']
    %11 = vsyncpa [#allocation3], 0
    %12 = vsyncpa [#allocation6], 0
    %13 = vsyncpa [#allocation4], 0
    %14 = vsyncpa [#allocation9], 0
    // Predicated region
    $region2: #{tpu_custom_call.1} parent=1 // pred_check
      _
    $region3: #{tpu_custom_call.1} parent=1 // pred_check_branch
      %16 = sbr.rel (0) target = $region5
    $region4: #{tpu_custom_call.1} parent=1 // pred_region
      %s18 = ssub.s32 256, 256
      %19 = vsyncadd [#allocation3], %s18
      %s20 = sshll.u32 [#allocation2], 4
      %s21 = int_to_ptr.vmem [resolvable:$true] %s20
      %26 = dma.hbm_to_vmem [thread:$0]  %s0, 256, %s21, [#allocation3], 128, 128, 8
    $region5: #{tpu_custom_call.1} parent=1 // pred_fallthru
      _
    // Predicated region
    $region6: #{tpu_custom_call.1} parent=1 // pred_check
      _
    $region7: #{tpu_custom_call.1} parent=1 // pred_check_branch
      %28 = sbr.rel (0) target = $region9
    $region8: #{tpu_custom_call.1} parent=1 // pred_region
      %s30 = ssub.s32 6144, 6144
      %31 = vsyncadd [#allocation6], %s30
      %s32 = sshll.u32 [#allocation5], 4
      %s33 = int_to_ptr.vmem [resolvable:$true] %s32
      %38 = dma.hbm_to_vmem [thread:$0]  %s1, 6144, %s33, [#allocation6], 384, 384, 24
    $region9: #{tpu_custom_call.1} parent=1 // pred_fallthru
      _
    // Predicated region
    $region10: #{tpu_custom_call.1} parent=1 // pred_check
      _
    $region11: #{tpu_custom_call.1} parent=1 // pred_check_branch
      %40 = sbr.rel (0) target = $region13
    $region12: #{tpu_custom_call.1} parent=1 // pred_region
      _
    $region13: #{tpu_custom_call.1} parent=1 // pred_fallthru
      _
    // Predicated region
    $region14: #{tpu_custom_call.1} parent=1 // pred_check
      _
    $region15: #{tpu_custom_call.1} parent=1 // pred_check_branch
      %42 = sbr.rel (0) target = $region17
    $region16: #{tpu_custom_call.1} parent=1 // pred_region
      %43 = dma.done [#allocation3], 256
    $region17: #{tpu_custom_call.1} parent=1 // pred_fallthru
      _
    // Predicated region
    $region18: #{tpu_custom_call.1} parent=1 // pred_check
      _
    $region19: #{tpu_custom_call.1} parent=1 // pred_check_branch
      %45 = sbr.rel (0) target = $region21
    $region20: #{tpu_custom_call.1} parent=1 // pred_region
      %46 = dma.done [#allocation6], 6144
    $region21: #{tpu_custom_call.1} parent=1 // pred_fallthru
      _
    %v47 = vld [vmem:[#allocation2] sm:$0xff]
    %v48 = vld [vmem:[#allocation2 + $0x8] sm:$0xff]
    %v49 = vld [vmem:[#allocation5] sm:$0xff]
    %v50 = vld [vmem:[#allocation5 + $0x8] sm:$0xff]
    %v51 = vld [vmem:[#allocation5 + $0x10] sm:$0xff]
    %v52 = vld [vmem:[#allocation5 + $0x18] sm:$0xff]
    %v53 = vld [vmem:[#allocation5 + $0x20] sm:$0xff]
    %v54 = vld [vmem:[#allocation5 + $0x28] sm:$0xff]
    %v55 = vld [vmem:[#allocation5 + $0x30] sm:$0xff]
    %v56 = vld [vmem:[#allocation5 + $0x38] sm:$0xff]
    %v57 = vld [vmem:[#allocation5 + $0x40] sm:$0xff]
    %v58 = vld [vmem:[#allocation5 + $0x48] sm:$0xff]
    %v59 = vld [vmem:[#allocation5 + $0x50] sm:$0xff]
    %v60 = vld [vmem:[#allocation5 + $0x58] sm:$0xff]
    %v61 = vld [vmem:[#allocation5 + $0x60] sm:$0xff]
    %v62 = vld [vmem:[#allocation5 + $0x68] sm:$0xff]
    %v63 = vld [vmem:[#allocation5 + $0x70] sm:$0xff]
    %v64 = vld [vmem:[#allocation5 + $0x78] sm:$0xff]
    %v65 = vld [vmem:[#allocation5 + $0x80] sm:$0xff]
    %v66 = vld [vmem:[#allocation5 + $0x88] sm:$0xff]
    %v67 = vld [vmem:[#allocation5 + $0x90] sm:$0xff]
    %v68 = vld [vmem:[#allocation5 + $0x98] sm:$0xff]
    %v69 = vld [vmem:[#allocation5 + $0xa0] sm:$0xff]
    %v70 = vld [vmem:[#allocation5 + $0xa8] sm:$0xff]
    %v71 = vld [vmem:[#allocation5 + $0xb0] sm:$0xff]
    %v72 = vld [vmem:[#allocation5 + $0xb8] sm:$0xff]
    %v73 = vld [vmem:[#allocation5 + $0xc0] sm:$0xff]
    %v74 = vld [vmem:[#allocation5 + $0xc8] sm:$0xff]
    %v75 = vld [vmem:[#allocation5 + $0xd0] sm:$0xff]
    %v76 = vld [vmem:[#allocation5 + $0xd8] sm:$0xff]
    %v77 = vld [vmem:[#allocation5 + $0xe0] sm:$0xff]
    %v78 = vld [vmem:[#allocation5 + $0xe8] sm:$0xff]
    %v79 = vld [vmem:[#allocation5 + $0xf0] sm:$0xff]
    %v80 = vld [vmem:[#allocation5 + $0xf8] sm:$0xff]
    %v81 = vld [vmem:[#allocation5 + $0x100] sm:$0xff]
    %v82 = vld [vmem:[#allocation5 + $0x108] sm:$0xff]
    %v83 = vld [vmem:[#allocation5 + $0x110] sm:$0xff]
    %v84 = vld [vmem:[#allocation5 + $0x118] sm:$0xff]
    %v85 = vld [vmem:[#allocation5 + $0x120] sm:$0xff]
    %v86 = vld [vmem:[#allocation5 + $0x128] sm:$0xff]
    %v87 = vld [vmem:[#allocation5 + $0x130] sm:$0xff]
    %v88 = vld [vmem:[#allocation5 + $0x138] sm:$0xff]
    %v89 = vld [vmem:[#allocation5 + $0x140] sm:$0xff]
    %v90 = vld [vmem:[#allocation5 + $0x148] sm:$0xff]
    %v91 = vld [vmem:[#allocation5 + $0x150] sm:$0xff]
    %v92 = vld [vmem:[#allocation5 + $0x158] sm:$0xff]
    %v93 = vld [vmem:[#allocation5 + $0x160] sm:$0xff]
    %v94 = vld [vmem:[#allocation5 + $0x168] sm:$0xff]
    %v95 = vld [vmem:[#allocation5 + $0x170] sm:$0xff]
    %v96 = vld [vmem:[#allocation5 + $0x178] sm:$0xff]
    %v97 = vld [vmem:[%s2] sm:$0x7]
    %v99 = vlaneseq
    %v100 = vshrl.u32 %v99, 7
    %v101 = vsub.s32 0, %v100
    %v102 = vrot.slane %v97, %v101
    %v103 = vlaneseq
    %v104 = vshrl.u32 %v103, 7
    %v105 = vsub.s32 1, %v104
    %v106 = vrot.slane %v97, %v105
    %v107 = vlaneseq
    %v108 = vshrl.u32 %v107, 7
    %v109 = vsub.s32 2, %v108
    %v110 = vrot.slane %v97, %v109
    %114 = vmatprep.subr.mxu0 %v50
    %115 = vmatpush1.msra.mxu0 %v49
    %116 = vmatprep.subr.mxu0 %v53
    %117 = vmatpush1.msra.mxu0 %v52
    %118 = vmatprep.subr.mxu0 %v56
    %119 = vmatpush1.msra.mxu0 %v55
    %120 = vmatprep.subr.mxu0 %v59
    %121 = vmatpush1.msra.mxu0 %v58
    %122 = vmatprep.subr.mxu0 %v62
    %123 = vmatpush1.msra.mxu0 %v61
    %124 = vmatprep.subr.mxu0 %v65
    %125 = vmatpush1.msra.mxu0 %v64
    %126 = vmatprep.subr.mxu0 %v68
    %127 = vmatpush1.msra.mxu0 %v67
    %128 = vmatprep.subr.mxu0 %v71
    %129 = vmatpush1.msra.mxu0 %v70
    %130 = vmatprep.subr.mxu0 %v74
    %131 = vmatpush1.msra.mxu0 %v73
    %132 = vmatprep.subr.mxu0 %v77
    %133 = vmatpush1.msra.mxu0 %v76
    %134 = vmatprep.subr.mxu0 %v80
    %135 = vmatpush1.msra.mxu0 %v79
    %136 = vmatprep.subr.mxu0 %v83
    %137 = vmatpush1.msra.mxu0 %v82
    %138 = vmatprep.subr.mxu0 %v86
    %139 = vmatpush1.msra.mxu0 %v85
    %140 = vmatprep.subr.mxu0 %v89
    %141 = vmatpush1.msra.mxu0 %v88
    %142 = vmatprep.subr.mxu0 %v92
    %143 = vmatpush1.msra.mxu0 %v91
    %144 = vmatprep.subr.mxu0 %v95
    %145 = vmatpush1.msra.mxu0 %v94
    %146 = vmatprep.subr.mxu0 0.0
    %147 = vmatpush1.msra.mxu0 0.0
    %148 = vmatprep.subr.mxu0 0.0
    %149 = vmatpush1.msra.mxu0 0.0
    %150 = vmatprep.subr.mxu0 0.0
    %151 = vmatpush1.msra.mxu0 0.0
    %152 = vmatprep.subr.mxu0 0.0
    %153 = vmatpush1.msra.mxu0 0.0
    %154 = vmatprep.subr.mxu0 0.0
    %155 = vmatpush1.msra.mxu0 0.0
    %156 = vmatprep.subr.mxu0 0.0
    %157 = vmatpush1.msra.mxu0 0.0
    %158 = vmatprep.subr.mxu0 0.0
    %159 = vmatpush1.msra.mxu0 0.0
    %160 = vmatprep.subr.mxu0 0.0
    %161 = vmatpush1.msra.mxu0 0.0
    %162 = vmatprep.subr.mxu0 0.0
    %163 = vmatpush1.msra.mxu0 0.0
    %164 = vmatprep.subr.mxu0 0.0
    %165 = vmatpush1.msra.mxu0 0.0
    %166 = vmatprep.subr.mxu0 0.0
    %167 = vmatpush1.msra.mxu0 0.0
    %168 = vmatprep.subr.mxu0 0.0
    %169 = vmatpush1.msra.mxu0 0.0
    %170 = vmatprep.subr.mxu0 0.0
    %171 = vmatpush1.msra.mxu0 0.0
    %172 = vmatprep.subr.mxu0 0.0
    %173 = vmatpush1.msra.mxu0 0.0
    %174 = vmatprep.subr.mxu0 0.0
    %175 = vmatpush1.msra.mxu0 0.0
    %176 = vmatprep.subr.mxu0 0.0
    %177 = vmatpush1.msra.mxu0 0.0
    %178 = vmatprep.mubr.f32.mxu0 0.0
    %179 = vmatmul.mubr.f32.gmra.mrb[0].mxu0 %v47
    %v180 = vpop.f32.mrb[0].mxu0
    %v181 = vadd.f32 %v102, %v180
    %v182 = vpop.f32.mrb[0].mxu0
    %v183 = vadd.f32 %v106, %v182
    %184 = vmatprep.mubr.f32.mxu0 0.0
    %185 = vmatmul.mubr.f32.gmra.mrb[0].mxu0 %v48
    %v186 = vpop.f32.mrb[0].mxu0
    %v187 = vadd.f32 %v102, %v186
    %v188 = vpop.f32.mrb[0].mxu0
    %v189 = vadd.f32 %v106, %v188
    %190 = vdwg.mxu0
    %191 = vmatprep.subr.mxu0 0.0
    %192 = vmatpush1.msra.mxu0 %v51
    %193 = vmatprep.subr.mxu0 0.0
    %194 = vmatpush1.msra.mxu0 %v54
    %195 = vmatprep.subr.mxu0 0.0
    %196 = vmatpush1.msra.mxu0 %v57
    %197 = vmatprep.subr.mxu0 0.0
    %198 = vmatpush1.msra.mxu0 %v60
    %199 = vmatprep.subr.mxu0 0.0
    %200 = vmatpush1.msra.mxu0 %v63
    %201 = vmatprep.subr.mxu0 0.0
    %202 = vmatpush1.msra.mxu0 %v66
    %203 = vmatprep.subr.mxu0 0.0
    %204 = vmatpush1.msra.mxu0 %v69
    %205 = vmatprep.subr.mxu0 0.0
    %206 = vmatpush1.msra.mxu0 %v72
    %207 = vmatprep.subr.mxu0 0.0
    %208 = vmatpush1.msra.mxu0 %v75
    %209 = vmatprep.subr.mxu0 0.0
    %210 = vmatpush1.msra.mxu0 %v78
    %211 = vmatprep.subr.mxu0 0.0
    %212 = vmatpush1.msra.mxu0 %v81
    %213 = vmatprep.subr.mxu0 0.0
    %214 = vmatpush1.msra.mxu0 %v84
    %215 = vmatprep.subr.mxu0 0.0
    %216 = vmatpush1.msra.mxu0 %v87
    %217 = vmatprep.subr.mxu0 0.0
    %218 = vmatpush1.msra.mxu0 %v90
    %219 = vmatprep.subr.mxu0 0.0
    %220 = vmatpush1.msra.mxu0 %v93
    %221 = vmatprep.subr.mxu0 0.0
    %222 = vmatpush1.msra.mxu0 %v96
    %223 = vmatprep.subr.mxu0 0.0
    %224 = vmatpush1.msra.mxu0 0.0
    %225 = vmatprep.subr.mxu0 0.0
    %226 = vmatpush1.msra.mxu0 0.0
    %227 = vmatprep.subr.mxu0 0.0
    %228 = vmatpush1.msra.mxu0 0.0
    %229 = vmatprep.subr.mxu0 0.0
    %230 = vmatpush1.msra.mxu0 0.0
    %231 = vmatprep.subr.mxu0 0.0
    %232 = vmatpush1.msra.mxu0 0.0
    %233 = vmatprep.subr.mxu0 0.0
    %234 = vmatpush1.msra.mxu0 0.0
    %235 = vmatprep.subr.mxu0 0.0
    %236 = vmatpush1.msra.mxu0 0.0
    %237 = vmatprep.subr.mxu0 0.0
    %238 = vmatpush1.msra.mxu0 0.0
    %239 = vmatprep.subr.mxu0 0.0
    %240 = vmatpush1.msra.mxu0 0.0
    %241 = vmatprep.subr.mxu0 0.0
    %242 = vmatpush1.msra.mxu0 0.0
    %243 = vmatprep.subr.mxu0 0.0
    %244 = vmatpush1.msra.mxu0 0.0
    %245 = vmatprep.subr.mxu0 0.0
    %246 = vmatpush1.msra.mxu0 0.0
    %247 = vmatprep.subr.mxu0 0.0
    %248 = vmatpush1.msra.mxu0 0.0
    %249 = vmatprep.subr.mxu0 0.0
    %250 = vmatpush1.msra.mxu0 0.0
    %251 = vmatprep.subr.mxu0 0.0
    %252 = vmatpush1.msra.mxu0 0.0
    %253 = vmatprep.subr.mxu0 0.0
    %254 = vmatpush1.msra.mxu0 0.0
    %255 = vmatprep.mubr.f32.mxu0 0.0
    %256 = vmatmul.mubr.f32.gmra.mrb[0].mxu0 %v47
    %v257 = vpop.f32.mrb[0].mxu0
    %v258 = vadd.f32 %v110, %v257
    %v259 = vpop.f32.mrb[0].mxu0
    %260 = vmatprep.mubr.f32.mxu0 0.0
    %261 = vmatmul.mubr.f32.gmra.mrb[0].mxu0 %v48
    %v262 = vpop.f32.mrb[0].mxu0
    %v263 = vadd.f32 %v110, %v262
    %v264 = vpop.f32.mrb[0].mxu0
    %265 = vdwg.mxu0
    %266 = vst [vmem:[#allocation7] sm:$0xff] %v181
    %267 = vst [vmem:[#allocation7 + $0x8] sm:$0xff] %v187
    %268 = vst [vmem:[#allocation8] sm:$0xff] %v183
    %269 = vst [vmem:[#allocation8 + $0x8] sm:$0xff] %v189
    %270 = vst [vmem:[#allocation10] sm:$0xff] %v258
    %271 = vst [vmem:[#allocation10 + $0x8] sm:$0xff] %v263
    // Predicated region
    $region22: #{tpu_custom_call.1} parent=1 // pred_check
      _
    $region23: #{tpu_custom_call.1} parent=1 // pred_check_branch
      %273 = sbr.rel (0) target = $region25
    $region24: #{tpu_custom_call.1} parent=1 // pred_region
      %s275 = ssub.s32 256, 256
      %276 = vsyncadd [#allocation4], %s275
      %s277 = sshll.u32 [#allocation7], 4
      %s278 = int_to_ptr.vmem [resolvable:$true] %s277
      %283 = dma.vmem_to_hbm [thread:$0]  %s278, 256, %s3, [#allocation4], 128, 128, 8
    $region25: #{tpu_custom_call.1} parent=1 // pred_fallthru
      _
    // Predicated region
    $region26: #{tpu_custom_call.1} parent=1 // pred_check
      _
    $region27: #{tpu_custom_call.1} parent=1 // pred_check_branch
      %285 = sbr.rel (0) target = $region29
    $region28: #{tpu_custom_call.1} parent=1 // pred_region
      %s287 = ssub.s32 256, 256
      %288 = vsyncadd [#allocation9], %s287
      %s289 = sshll.u32 [#allocation8], 4
      %s290 = int_to_ptr.vmem [resolvable:$true] %s289
      %295 = dma.vmem_to_hbm [thread:$0]  %s290, 256, %s4, [#allocation9], 128, 128, 8
    $region29: #{tpu_custom_call.1} parent=1 // pred_fallthru
      _
    // Predicated region
    $region30: #{tpu_custom_call.1} parent=1 // pred_check
      _
    $region31: #{tpu_custom_call.1} parent=1 // pred_check_branch
      %297 = sbr.rel (0) target = $region33
    $region32: #{tpu_custom_call.1} parent=1 // pred_region
      %s299 = ssub.s32 256, 256
      %300 = vsyncadd [#allocation9], %s299
      %s301 = sshll.u32 [#allocation10], 4
      %s302 = int_to_ptr.vmem [resolvable:$true] %s301
      %307 = dma.vmem_to_hbm [thread:$0]  %s302, 256, %s5, [#allocation9], 128, 128, 8
    $region33: #{tpu_custom_call.1} parent=1 // pred_fallthru
      _
    // Predicated region
    $region34: #{tpu_custom_call.1} parent=1 // pred_check
      _
    $region35: #{tpu_custom_call.1} parent=1 // pred_check_branch
      %309 = sbr.rel (0) target = $region37
    $region36: #{tpu_custom_call.1} parent=1 // pred_region
      %310 = dma.done [#allocation4], 256
    $region37: #{tpu_custom_call.1} parent=1 // pred_fallthru
      _
    // Predicated region
    $region38: #{tpu_custom_call.1} parent=1 // pred_check
      _
    $region39: #{tpu_custom_call.1} parent=1 // pred_check_branch
      %312 = sbr.rel (0) target = $region41
    $region40: #{tpu_custom_call.1} parent=1 // pred_region
      %313 = dma.done [#allocation9], 256
    $region41: #{tpu_custom_call.1} parent=1 // pred_fallthru
      _
    // Predicated region
    $region42: #{tpu_custom_call.1} parent=1 // pred_check
      _
    $region43: #{tpu_custom_call.1} parent=1 // pred_check_branch
      %315 = sbr.rel (0) target = $region45
    $region44: #{tpu_custom_call.1} parent=1 // pred_region
      %316 = dma.done [#allocation9], 256
    $region45: #{tpu_custom_call.1} parent=1 // pred_fallthru
      _
    %317 = vsyncpa [#allocation3], 1
    %318 = vsyncpa [#allocation6], 1
    %319 = vsyncpa [#allocation4], 1
    %320 = vsyncpa [#allocation9], 1

</llo_original>
